<compile_context>
chip_gen: v7x
topology: tpu7x:2x2x1
jax: 0.10.0
libtpu: 0.0.40
codegen_flags: <defaults>
</compile_context>

<pallas_src>
import functools

import jax
import jax.numpy as jnp
from jax.experimental import pallas as pl
from jax.experimental.pallas import tpu as pltpu


def _gating_kernel(x_ref, w_ref, b_ref, o_ref):
    # x: (TB, D) VMEM tile, w: (2, D) VMEM (resident), b: (2,) SMEM scalars,
    # o: (2, TB) VMEM tile (batch axis on lanes -> lane-dense stores).
    x = x_ref[...]
    w = w_ref[...]
    # (2, TB) = W (2, D) contracted with x (TB, D) over D.
    logits = jax.lax.dot_general(
        w, x,
        dimension_numbers=(((1,), (1,)), ((), ())),
        preferred_element_type=jnp.float32,
    )
    # Bias as two sublane-broadcast scalar adds (no iota/where over padding).
    o_ref[0:1, :] = jax.nn.sigmoid(logits[0:1, :] + b_ref[0]).astype(o_ref.dtype)
    o_ref[1:2, :] = jax.nn.sigmoid(logits[1:2, :] + b_ref[1]).astype(o_ref.dtype)


def _vmem_budgets():
    """Per-generation (x_tiles_budget_bytes, vmem_limit_bytes)."""
    vmem_cap = 64 * 1024 * 1024  # conservative default (v7x physical VMEM)
    try:
        info = pltpu.get_tpu_info()
        vmem_cap = int(getattr(info, "vmem_capacity_bytes", vmem_cap))
    except Exception:
        pass
    if vmem_cap >= 100 * 1024 * 1024:
        # v5e / v6e: 128 MiB physical VMEM -> bigger tiles, fewer grid steps.
        return 28 * 1024 * 1024, 64 * 1024 * 1024
    # v7x: 64 MiB physical / 32 MiB scoped default -> keep tiles modest.
    return 14 * 1024 * 1024, 36 * 1024 * 1024


def _choose_tb(batch, feat, itemsize, x_tiles_budget_bytes):
    """Rows per batch tile.

    The two double-buffered (TB, D) x tiles must fit the budget, and TB must
    be a multiple of 128 (lane-dense (2, TB) output blocks; also covers the
    bf16 (16,128) / int8 (32,128) packed sublane layouts) unless TB == batch.
    """
    bytes_per_row = max(1, feat * itemsize)
    tb = x_tiles_budget_bytes // (2 * bytes_per_row)
    if tb >= batch:
        # Whole batch fits in one tile. For large B, split into 2 tiles so the
        # "parallel" batch axis can shard over v7x's 2 TensorCores (neutral on
        # v5e/v6e, which have 1 TC).
        if batch >= 1024:
            half = ((batch + 1) // 2 + 127) // 128 * 128
            if half < batch:
                return half
        return batch
    # 128-row floor keeps output blocks lane-dense even under a tight budget
    # (the vmem limit below keeps headroom for that case).
    return max(128, (tb // 128) * 128)


@functools.partial(jax.jit, static_argnames=("tb",))
def gating_mechanism(x, weight, bias, tb=None):
    """x: (B, D); weight: (2, D) (PyTorch nn.Linear layout); bias: (2,)."""
    B, D = x.shape
    w = weight.astype(x.dtype)          # keep native (2, D) layout, no transpose
    b = bias.astype(jnp.float32)        # (2,) -> SMEM scalars

    x_budget, vmem_limit = _vmem_budgets()
    itemsize = x.dtype.itemsize
    if tb is None:
        tb = _choose_tb(B, D, itemsize, x_budget)
    grid = (pl.cdiv(B, tb),)

    # Trace-time VMEM accounting: double-buffered x tiles + sublane-padded
    # (2->8 rows) weight and output buffers, plus margin.
    need = 2 * (tb * D * itemsize) + 2 * (8 * D * itemsize) + 2 * (8 * tb * itemsize)
    assert need + (2 << 20) <= vmem_limit, (
        f"tile config needs ~{need} B of VMEM, over the {vmem_limit} B limit")

    cost = pl.CostEstimate(
        flops=2 * B * D * 2 + 2 * B,                    # matmul + bias add
        transcendentals=2 * B,                          # sigmoid
        bytes_accessed=B * D * itemsize + 2 * D * itemsize + 2 * 4 + 2 * B * itemsize,
    )

    out_t = pl.pallas_call(
        _gating_kernel,
        out_shape=jax.ShapeDtypeStruct((2, B), x.dtype),
        grid_spec=pltpu.PrefetchScalarGridSpec(
            num_scalar_prefetch=0,
            grid=grid,
            in_specs=[
                pl.BlockSpec((tb, D), lambda i: (i, 0)),            # x: batch-tiled
                pl.BlockSpec((2, D), lambda i: (0, 0)),             # weight: resident, native layout
                pl.BlockSpec(memory_space=pltpu.MemorySpace.SMEM),  # bias: SMEM scalars
            ],
            out_specs=pl.BlockSpec((2, tb), lambda i: (0, i)),      # lane-dense output
        ),
        compiler_params=pltpu.CompilerParams(
            dimension_semantics=("parallel",),   # shard batch axis over TCs (v7x)
            vmem_limit_bytes=vmem_limit,
        ),
        cost_estimate=cost,
    )(x, w, b)
    return out_t.T                                                   # (B, 2)


if __name__ == "__main__":
    # Small test shape consistent with the module (batch=8, input_dim=32).
    key = jax.random.PRNGKey(0)
    B, D = 8, 32
    k_x, k_w, k_b = jax.random.split(key, 3)

    bound = 1.0 / (D ** 0.5)
    weight = jax.random.uniform(k_w, (2, D), jnp.float32, -bound, bound)
    bias = jax.random.uniform(k_b, (2,), jnp.float32, -bound, bound)
    x = jax.random.normal(k_x, (B, D), jnp.float32)

    out = jax.block_until_ready(gating_mechanism(x, weight, bias))
    ref = jax.nn.sigmoid(x @ weight.T + bias)
    assert out.shape == (B, 2)
    assert jnp.allclose(out, ref, atol=1e-5, rtol=1e-5)

    # Second check: multi-step batch grid with a partial tail tile (tb=128).
    B2, D2 = 200, 128
    k_x2, k_w2, k_b2 = jax.random.split(jax.random.PRNGKey(1), 3)
    bound2 = 1.0 / (D2 ** 0.5)
    weight2 = jax.random.uniform(k_w2, (2, D2), jnp.float32, -bound2, bound2)
    bias2 = jax.random.uniform(k_b2, (2,), jnp.float32, -bound2, bound2)
    x2 = jax.random.normal(k_x2, (B2, D2), jnp.float32)

    out2 = jax.block_until_ready(gating_mechanism(x2, weight2, bias2, tb=128))
    ref2 = jax.nn.sigmoid(x2 @ weight2.T + bias2)
    assert out2.shape == (B2, 2)
    assert jnp.allclose(out2, ref2, atol=1e-5, rtol=1e-5)

    print("KERNEL_OK")
</pallas_src>

<mosaic_0001>
module attributes {stable_mosaic.version = 11 : i64} {
  func.func @_gating_kernel(%arg0: i32, %arg1: memref<8x32xf32, #tpu.memory_space<vmem>>, %arg2: memref<2x32xf32, #tpu.memory_space<vmem>>, %arg3: memref<2xf32, #tpu.memory_space<smem>>, %arg4: memref<2x8xf32, #tpu.memory_space<vmem>>) attributes {dimension_semantics = [#tpu.dimension_semantics<parallel>], iteration_bounds = array<i64: 1>, scalar_prefetch = 0 : i64, scratch_operands = 0 : i64, tpu.core_type = #tpu.core_type<tc>, window_params = [{transform_indices = @transform_0, window_bounds = array<i64: 8, 32>}, {pipeline_mode = #tpu.pipeline_mode<synchronous>, transform_indices = @transform_1, window_bounds = array<i64: 2, 32>}, {transform_indices = @transform_2, window_bounds = array<i64: 2>}, {transform_indices = @transform_3, window_bounds = array<i64: 2, 8>}]} {
    %c0 = arith.constant 0 : index
    %c0_0 = arith.constant 0 : index
    %0 = vector.load %arg1[%c0, %c0_0] : memref<8x32xf32, #tpu.memory_space<vmem>>, vector<8x32xf32>
    %c0_1 = arith.constant 0 : index
    %c0_2 = arith.constant 0 : index
    %1 = vector.load %arg2[%c0_1, %c0_2] : memref<2x32xf32, #tpu.memory_space<vmem>>, vector<2x32xf32>
    %cst = arith.constant dense<0.000000e+00> : vector<2x8xf32>
    %2 = tpu.matmul %1, %0, %cst {dimension_numbers = #tpu.dot_dimension_numbers<[1], [1], [0], [0], [0, 0, 1, 0], [], []>} : vector<2x32xf32>, vector<8x32xf32>, vector<2x8xf32> -> vector<2x8xf32>
    %3 = vector.extract_strided_slice %2 {offsets = [0, 0], sizes = [1, 8], strides = [1, 1]} : vector<2x8xf32> to vector<1x8xf32>
    %c0_3 = arith.constant 0 : index
    %4 = memref.load %arg3[%c0_3] : memref<2xf32, #tpu.memory_space<smem>>
    %5 = vector.broadcast %4 : f32 to vector<1x8xf32>
    %6 = arith.addf %3, %5 : vector<1x8xf32>
    %7 = arith.negf %6 : vector<1x8xf32>
    %8 = math.exp %7 : vector<1x8xf32>
    %cst_4 = arith.constant 1.000000e+00 : f32
    %9 = vector.broadcast %cst_4 : f32 to vector<1x8xf32>
    %10 = arith.addf %9, %8 : vector<1x8xf32>
    %11 = arith.divf %9, %10 : vector<1x8xf32>
    %c0_5 = arith.constant 0 : index
    %c0_6 = arith.constant 0 : index
    %12 = vector.load %arg4[%c0_5, %c0_6] : memref<2x8xf32, #tpu.memory_space<vmem>>, vector<1x8xf32>
    tpu.vector_store %arg4[%c0_5, %c0_6], %11 {strides = array<i32>} : memref<2x8xf32, #tpu.memory_space<vmem>>, vector<1x8xf32>,
    %13 = vector.extract_strided_slice %2 {offsets = [1, 0], sizes = [1, 8], strides = [1, 1]} : vector<2x8xf32> to vector<1x8xf32>
    %c1 = arith.constant 1 : index
    %14 = memref.load %arg3[%c1] : memref<2xf32, #tpu.memory_space<smem>>
    %15 = vector.broadcast %14 : f32 to vector<1x8xf32>
    %16 = arith.addf %13, %15 : vector<1x8xf32>
    %17 = arith.negf %16 : vector<1x8xf32>
    %18 = math.exp %17 : vector<1x8xf32>
    %cst_7 = arith.constant 1.000000e+00 : f32
    %19 = vector.broadcast %cst_7 : f32 to vector<1x8xf32>
    %20 = arith.addf %19, %18 : vector<1x8xf32>
    %21 = arith.divf %19, %20 : vector<1x8xf32>
    %c1_8 = arith.constant 1 : index
    %c0_9 = arith.constant 0 : index
    %22 = vector.load %arg4[%c1_8, %c0_9] : memref<2x8xf32, #tpu.memory_space<vmem>>, vector<1x8xf32>
    tpu.vector_store %arg4[%c1_8, %c0_9], %21 {strides = array<i32>} : memref<2x8xf32, #tpu.memory_space<vmem>>, vector<1x8xf32>,
    return
  }
  func.func @transform_0(%arg0: i32) -> (i32, i32) {
    %c0_i32 = arith.constant 0 : i32
    %c0_i32_0 = arith.constant 0 : i32
    return %arg0, %c0_i32 : i32, i32
  }
  func.func @transform_1(%arg0: i32) -> (i32, i32) {
    %c0_i32 = arith.constant 0 : i32
    %c0_i32_0 = arith.constant 0 : i32
    %c0_i32_1 = arith.constant 0 : i32
    return %c0_i32, %c0_i32_0 : i32, i32
  }
  func.func @transform_2(%arg0: i32) -> i32 {
    %c0_i32 = arith.constant 0 : i32
    %c0_i32_0 = arith.constant 0 : i32
    return %c0_i32 : i32
  }
  func.func @transform_3(%arg0: i32) -> (i32, i32) {
    %c0_i32 = arith.constant 0 : i32
    %c0_i32_0 = arith.constant 0 : i32
    return %c0_i32, %arg0 : i32, i32
  }
}

</mosaic_0001>

<llo_original>
// kernel: gating_mechanism.1
$region0: #{gating_mechanism.1}
  #allocation0 [shape = 'u32[]', space=smem, size = 0x4, offset = 0x4, fixed_abs, tag = 'smem constant byte address 0x4 - core index']
  #allocation1 [shape = 'u32[144,128]{1,0:T(1,128)}', space=vmem, size = 0x12000, scoped, tag = 'internal scratch']
  %s0 = inlined_call_operand.hbm [shape: f32[8,32], index: 0, kind: input, shape index: {}]
  %s1 = inlined_call_operand.vmem [shape: f32[2,32], index: 1, kind: input, shape index: {}]
  %s2 = inlined_call_operand.vmem [shape: f32[2], index: 2, kind: input, shape index: {}]
  %s3 = inlined_call_operand.hbm [shape: f32[2,8], index: 3, kind: output, shape index: {}]
  %s4 = sld [smem:[#allocation0]]
  $region30: #{gating_mechanism.1} parent=0
    _
  %s6 = ssub.s32 1, %s4
  %s7 = scalar_select 0, %s6, %s4
  $region1: #{gating_mechanism.1} parent=0
    #allocation2 [shape = 'u8[4096]{0}', space=vmem, size = 0x1000, scoped, tag = 'input window, operand 0, single buffered']
    #allocation3 [shape = 's32[1]{0}', space=sflag, size = 0x4, scoped, tag = 'scoped memory for gating_mechanism.1']
    #allocation4 [shape = 's32[1]{0}', space=sflag, size = 0x4, scoped, tag = 'scoped memory for gating_mechanism.1']
    #allocation5 [shape = 's32[1]{0}', space=sflag, size = 0x4, scoped, tag = 'scoped memory for gating_mechanism.1']
    #allocation6 [shape = 'u8[512]{0}', space=smem, size = 0x200, scoped, tag = 'input window, operand 2, single buffered']
    #allocation7 [shape = 'u8[1024]{0}', space=vmem, size = 0x400, scoped, tag = 'output window, operand 0, single buffered']
    %8 = vsyncpa [#allocation3], 0
    %9 = vsyncpa [#allocation5], 0
    %10 = vsyncpa [#allocation4], 0
    // Predicated region
    $region2: #{gating_mechanism.1} parent=1 // pred_check
      _
    $region3: #{gating_mechanism.1} parent=1 // pred_check_branch
      %12 = sbr.rel (0) target = $region5
    $region4: #{gating_mechanism.1} parent=1 // pred_region
      %s14 = ssub.s32 128, 128
      %15 = vsyncadd [#allocation3], %s14
      %s17 = sshll.u32 [#allocation2], 4
      %s18 = int_to_ptr.vmem [resolvable:$true] %s17
      %20 = dma.hbm_to_vmem [thread:$0]  %s0, 128, %s18, [#allocation3]
    $region5: #{gating_mechanism.1} parent=1 // pred_fallthru
      _
    // Predicated region
    $region6: #{gating_mechanism.1} parent=1 // pred_check
      _
    $region7: #{gating_mechanism.1} parent=1 // pred_check_branch
      %22 = sbr.rel (0) target = $region9
    $region8: #{gating_mechanism.1} parent=1 // pred_region
      _
    $region9: #{gating_mechanism.1} parent=1 // pred_fallthru
      _
    // Predicated region
    $region10: #{gating_mechanism.1} parent=1 // pred_check
      _
    $region11: #{gating_mechanism.1} parent=1 // pred_check_branch
      %24 = sbr.rel (0) target = $region13
    $region12: #{gating_mechanism.1} parent=1 // pred_region
      %s26 = ssub.s32 16, 16
      %27 = vsyncadd [#allocation5], %s26
      %s29 = sshll.u32 %s2, 4
      %s30 = int_to_ptr.vmem [resolvable:$true] %s29
      %32 = dma.vmem_to_smem %s30, 16, [#allocation6], [#allocation5]
    $region13: #{gating_mechanism.1} parent=1 // pred_fallthru
      _
    // Predicated region
    $region14: #{gating_mechanism.1} parent=1 // pred_check
      _
    $region15: #{gating_mechanism.1} parent=1 // pred_check_branch
      %34 = sbr.rel (0) target = $region17
    $region16: #{gating_mechanism.1} parent=1 // pred_region
      %35 = dma.done [#allocation3], 128
    $region17: #{gating_mechanism.1} parent=1 // pred_fallthru
      _
    // Predicated region
    $region18: #{gating_mechanism.1} parent=1 // pred_check
      _
    $region19: #{gating_mechanism.1} parent=1 // pred_check_branch
      %37 = sbr.rel (0) target = $region21
    $region20: #{gating_mechanism.1} parent=1 // pred_region
      %38 = dma.done [#allocation5], 16
    $region21: #{gating_mechanism.1} parent=1 // pred_fallthru
      _
    %39 = sfence
    %v40 = vld [vmem:[#allocation2] sm:$0xff]
    %v41 = vld [vmem:[%s1] sm:$0x3]
    %vm42 = vcmask 261120
    %v44 = vsel %vm42, %v41, 0
    %v47 = vsel %vm42, %v40, 0
    %49 = vmatprep.subr.mxu0 0.0
    %50 = vmatpush1.xpose.msra.mxu0 %v47
    %51 = vmatprep.subr.mxu0 0.0
    %52 = vmatpush1.xpose.msra.mxu0 0.0
    %53 = vmatprep.subr.mxu0 0.0
    %54 = vmatpush1.xpose.msra.mxu0 0.0
    %55 = vmatprep.subr.mxu0 0.0
    %56 = vmatpush1.xpose.msra.mxu0 0.0
    %57 = vmatprep.subr.mxu0 0.0
    %58 = vmatpush1.xpose.msra.mxu0 0.0
    %59 = vmatprep.subr.mxu0 0.0
    %60 = vmatpush1.xpose.msra.mxu0 0.0
    %61 = vmatprep.subr.mxu0 0.0
    %62 = vmatpush1.xpose.msra.mxu0 0.0
    %63 = vmatprep.subr.mxu0 0.0
    %64 = vmatpush1.xpose.msra.mxu0 0.0
    %65 = vmatprep.subr.mxu0 0.0
    %66 = vmatpush1.xpose.msra.mxu0 0.0
    %67 = vmatprep.subr.mxu0 0.0
    %68 = vmatpush1.xpose.msra.mxu0 0.0
    %69 = vmatprep.subr.mxu0 0.0
    %70 = vmatpush1.xpose.msra.mxu0 0.0
    %71 = vmatprep.subr.mxu0 0.0
    %72 = vmatpush1.xpose.msra.mxu0 0.0
    %73 = vmatprep.subr.mxu0 0.0
    %74 = vmatpush1.xpose.msra.mxu0 0.0
    %75 = vmatprep.subr.mxu0 0.0
    %76 = vmatpush1.xpose.msra.mxu0 0.0
    %77 = vmatprep.subr.mxu0 0.0
    %78 = vmatpush1.xpose.msra.mxu0 0.0
    %79 = vmatprep.subr.mxu0 0.0
    %80 = vmatpush1.xpose.msra.mxu0 0.0
    %81 = vmatprep.subr.mxu0 0.0
    %82 = vmatpush1.xpose.msra.mxu0 0.0
    %83 = vmatprep.subr.mxu0 0.0
    %84 = vmatpush1.xpose.msra.mxu0 0.0
    %85 = vmatprep.subr.mxu0 0.0
    %86 = vmatpush1.xpose.msra.mxu0 0.0
    %87 = vmatprep.subr.mxu0 0.0
    %88 = vmatpush1.xpose.msra.mxu0 0.0
    %89 = vmatprep.subr.mxu0 0.0
    %90 = vmatpush1.xpose.msra.mxu0 0.0
    %91 = vmatprep.subr.mxu0 0.0
    %92 = vmatpush1.xpose.msra.mxu0 0.0
    %93 = vmatprep.subr.mxu0 0.0
    %94 = vmatpush1.xpose.msra.mxu0 0.0
    %95 = vmatprep.subr.mxu0 0.0
    %96 = vmatpush1.xpose.msra.mxu0 0.0
    %97 = vmatprep.subr.mxu0 0.0
    %98 = vmatpush1.xpose.msra.mxu0 0.0
    %99 = vmatprep.subr.mxu0 0.0
    %100 = vmatpush1.xpose.msra.mxu0 0.0
    %101 = vmatprep.subr.mxu0 0.0
    %102 = vmatpush1.xpose.msra.mxu0 0.0
    %103 = vmatprep.subr.mxu0 0.0
    %104 = vmatpush1.xpose.msra.mxu0 0.0
    %105 = vmatprep.subr.mxu0 0.0
    %106 = vmatpush1.xpose.msra.mxu0 0.0
    %107 = vmatprep.subr.mxu0 0.0
    %108 = vmatpush1.xpose.msra.mxu0 0.0
    %109 = vmatprep.subr.mxu0 0.0
    %110 = vmatpush1.xpose.msra.mxu0 0.0
    %111 = vmatprep.subr.mxu0 0.0
    %112 = vmatpush1.xpose.msra.mxu0 0.0
    %113 = vmatprep.mubr.f32.mxu0 0.0
    %114 = vmatmul.mubr.f32.gmra.mrb[0].mxu0 %v44
    %v115 = vpop.f32.mrb[0].mxu0
    %v116 = vadd.f32 0.0, %v115
    %v117 = vpop.f32.mrb[0].mxu0
    %118 = vdwg.mxu0
    %s119 = sld [smem:[#allocation6]]
    %v120 = vstv %s119
    %v121 = vadd.f32 %v116, %v120
    %v122 = vxor.u32 %v121, 2147483648
    %v123 = vmul.f32 %v122, 1.442695
    %v124 = vpow.pop %v123
    %v125 = vadd.f32 %v124, 1.0
    %v126 = vrcp.pop %v125
    %v127 = vmul.f32 1.0, %v126
    %vm128 = vcmask 57344
    %129 = vst.msk [vmem:[#allocation7] sm:$0x1] %vm128, %v127
    %s130 = sld [smem:[#allocation6 + $0x1]]
    %v131 = vstv %s130
    %v132 = vadd.f32 %v116, %v131
    %v133 = vxor.u32 %v132, 2147483648
    %v134 = vmul.f32 %v133, 1.442695
    %v135 = vpow.pop %v134
    %v136 = vadd.f32 %v135, 1.0
    %v137 = vrcp.pop %v136
    %v138 = vmul.f32 1.0, %v137
    %vm139 = vcmask 58369
    %140 = vst.msk [vmem:[#allocation7] sm:$0x2] %vm139, %v138
    // Predicated region
    $region22: #{gating_mechanism.1} parent=1 // pred_check
      _
    $region23: #{gating_mechanism.1} parent=1 // pred_check_branch
      %142 = sbr.rel (0) target = $region25
    $region24: #{gating_mechanism.1} parent=1 // pred_region
      %s144 = ssub.s32 32, 32
      %145 = vsyncadd [#allocation4], %s144
      %s147 = sshll.u32 [#allocation7], 4
      %s148 = int_to_ptr.vmem [resolvable:$true] %s147
      %150 = dma.vmem_to_hbm [thread:$0]  %s148, 32, %s3, [#allocation4]
    $region25: #{gating_mechanism.1} parent=1 // pred_fallthru
      _
    // Predicated region
    $region26: #{gating_mechanism.1} parent=1 // pred_check
      _
    $region27: #{gating_mechanism.1} parent=1 // pred_check_branch
      %152 = sbr.rel (0) target = $region29
    $region28: #{gating_mechanism.1} parent=1 // pred_region
      %153 = dma.done [#allocation4], 32
    $region29: #{gating_mechanism.1} parent=1 // pred_fallthru
      _
    %154 = vsyncpa [#allocation3], 1
    %155 = vsyncpa [#allocation4], 1
    %156 = vsyncpa [#allocation5], 1

</llo_original>
